<compile_context>
chip_gen: v7x
topology: tpu7x:2x2x1
jax: 0.10.0
libtpu: 0.0.40
codegen_flags: <defaults>
</compile_context>

<pallas_src>
import functools

import jax
import jax.numpy as jnp
from jax import lax
from jax.experimental import pallas as pl
from jax.experimental.pallas import tpu as pltpu


def _round_up(x, m):
    return ((x + m - 1) // m) * m


def _sublane_mult(dtype):
    """Native sublane multiple for the second-to-last tile dim."""
    size = jnp.dtype(dtype).itemsize
    if size >= 4:
        return 8
    if size == 2:
        return 16
    return 32


def _tpu_generation():
    try:
        kind = jax.devices()[0].device_kind.lower()
    except Exception:
        return "unknown"
    if "v7" in kind:
        return "v7x"
    if "v6" in kind:
        return "v6e"
    if "v5 lite" in kind or "v5lite" in kind or "v5e" in kind:
        return "v5e"
    if "v5" in kind:
        return "v5p"
    return "unknown"


# gen -> (vmem_limit_bytes, max_tn, max_tk, force_two_parallel_blocks)
_GEN_CONFIG = {
    "v7x": (48 * 1024 * 1024, 512, 512, True),
    "v6e": (96 * 1024 * 1024, 1024, 1024, False),
    "v5e": (96 * 1024 * 1024, 1024, 1024, False),
    "v5p": (96 * 1024 * 1024, 1024, 1024, False),
    "unknown": (32 * 1024 * 1024, 512, 512, True),
}


def _pick_nk(dim, cap):
    """Lane-dim tile: multiple of 128, <= cap, preferring exact divisors (no pad)."""
    d_a = _round_up(dim, 128)
    if d_a <= cap:
        return d_a
    best, t = 128, 256
    while t <= cap:
        if d_a % t == 0:
            best = t
        t += 128
    return best


def _pick_tm(dim, sub, single_cap=1024, multi_cap=512):
    """M tile: full M when small (single pass over weights), else a divisor tile."""
    d_a = _round_up(dim, sub)
    if d_a <= single_cap:
        return d_a
    best, t = 0, _round_up(128, sub)
    while t <= multi_cap:
        if d_a % t == 0:
            best = t
        t += sub
    return best if best else multi_cap


def _le_linear_fused_kernel(ilayer_ref, x_ref, wb_ref, wi_ref, bb_ref, bi_ref,
                            o_ref, acc_ref, *, mxu_dtype):
    # grid = (M//tm, N//tn, K//tk); K is the reduction axis (last, "arbitrary").
    k = pl.program_id(2)
    il = ilayer_ref[0]                                      # f32 scalar in SMEM

    w_dtype = mxu_dtype if mxu_dtype is not None else x_ref.dtype
    # Fused learngene weight (tn, tk); cast back to the MXU operand dtype so
    # bf16 inputs keep the MXU in its native bf16 mode.
    w = (wb_ref[...] + il * wi_ref[...]).astype(w_dtype)
    x = x_ref[...]
    if mxu_dtype is not None and x.dtype != mxu_dtype:
        x = x.astype(mxu_dtype)

    # x (tm, tk) . w (tn, tk), contracted on dim 1 of both -> (tm, tn).
    p = lax.dot_general(x, w, dimension_numbers=(((1,), (1,)), ((), ())),
                        preferred_element_type=jnp.float32)

    @pl.when(k == 0)
    def _():
        acc_ref[...] = p                                   # no zero-fill + add

    @pl.when(k > 0)
    def _():
        acc_ref[...] += p

    @pl.when(k == pl.num_programs(2) - 1)
    def _():
        b = (bb_ref[...] + il * bi_ref[...]).astype(jnp.float32)   # (1, tn)
        o_ref[...] = (acc_ref[...] + b).astype(o_ref.dtype)


def _le_linear_prefused_kernel(x_ref, w_ref, b_ref, o_ref, acc_ref, *, mxu_dtype):
    # Same grid; weight/bias already fused in the wrapper.
    k = pl.program_id(2)
    x = x_ref[...]
    if mxu_dtype is not None and x.dtype != mxu_dtype:
        x = x.astype(mxu_dtype)

    p = lax.dot_general(x, w_ref[...],
                        dimension_numbers=(((1,), (1,)), ((), ())),
                        preferred_element_type=jnp.float32)

    @pl.when(k == 0)
    def _():
        acc_ref[...] = p

    @pl.when(k > 0)
    def _():
        acc_ref[...] += p

    @pl.when(k == pl.num_programs(2) - 1)
    def _():
        o_ref[...] = (acc_ref[...] + b_ref[...]).astype(o_ref.dtype)


def le_linear(x, weight_base, weight_ilayer, bias_base=None, bias_ilayer=None,
              ilayer=0.0, *, tm=None, tn=None, tk=None, prefuse=None,
              mxu_dtype=None):
    """Pallas implementation of LELinear.forward.

    x:            (..., in_features)
    weight_base / weight_ilayer: (out_features, in_features)  [PyTorch layout]
    bias_base / bias_ilayer:     (out_features,) or None
    ilayer: python/JAX scalar (set externally by TLEG).
    mxu_dtype: optional dtype for the MXU operands (e.g. jnp.bfloat16).
    """
    orig_lead = x.shape[:-1]
    K = x.shape[-1]
    N = weight_base.shape[0]
    x2 = x.reshape(-1, K)
    M = x2.shape[0]

    gen = _tpu_generation()
    vmem_limit, max_tn, max_tk, want_two_blocks = _GEN_CONFIG.get(
        gen, _GEN_CONFIG["unknown"])

    # --- Tile selection ------------------------------------------------------
    sub = _sublane_mult(x.dtype)
    tm = _pick_tm(M, sub) if tm is None else _round_up(tm, sub)
    Mp = _round_up(M, tm)
    grid_m = Mp // tm

    # Prefuse only when the weights would be re-streamed >= 3 times per call;
    # at grid_m <= 2 the in-kernel fusion is cheaper (no extra N*K write+read).
    if prefuse is None:
        prefuse = grid_m >= 3

    tk_cap = max_tk if prefuse else min(512, max_tk)   # bound fused-weight temp
    tk = _pick_nk(K, tk_cap) if tk is None else _round_up(tk, 128)
    tn_auto = tn is None
    tn = _pick_nk(N, max_tn) if tn is None else _round_up(tn, 128)

    Kp = _round_up(K, tk)
    Np = _round_up(N, tn)
    grid_k = Kp // tk
    grid_n = Np // tn

    # v7x megacore: make sure the parallel axes expose >= 2 grid blocks.
    if want_two_blocks and tn_auto and grid_m * grid_n < 2:
        Np0 = _round_up(N, 128)
        if Np0 >= 256:
            best, t = 128, 256
            while 2 * t <= Np0:
                if Np0 % t == 0:
                    best = t
                t += 128
            tn = best
            Np = Np0
            grid_n = Np // tn

    if (Mp, Kp) != (M, K):
        x2 = jnp.pad(x2, ((0, Mp - M), (0, Kp - K)))   # zero K-pad is exact

    # --- Bias handling (either/both may be None) -----------------------------
    pdtype = weight_base.dtype
    if bias_base is None and bias_ilayer is None:
        bias_base = jnp.zeros((N,), pdtype)
        bias_ilayer = jnp.zeros((N,), pdtype)
    else:
        if bias_base is None:
            bias_base = jnp.zeros_like(bias_ilayer)
        if bias_ilayer is None:
            bias_ilayer = jnp.zeros_like(bias_base)

    cparams = pltpu.CompilerParams(
        dimension_semantics=("parallel", "parallel", "arbitrary"),
        vmem_limit_bytes=vmem_limit)

    il_f32 = jnp.asarray(ilayer, dtype=jnp.float32)
    operand_dtype = mxu_dtype if mxu_dtype is not None else x.dtype

    if prefuse:
        w = (weight_base.astype(jnp.float32)
             + il_f32 * weight_ilayer.astype(jnp.float32)).astype(operand_dtype)
        b = (bias_base.astype(jnp.float32)
             + il_f32 * bias_ilayer.astype(jnp.float32)).reshape(1, N)
        if (Np, Kp) != (N, K):
            w = jnp.pad(w, ((0, Np - N), (0, Kp - K)))
        if Np != N:
            b = jnp.pad(b, ((0, 0), (0, Np - N)))

        kernel = functools.partial(_le_linear_prefused_kernel, mxu_dtype=mxu_dtype)
        out = pl.pallas_call(
            kernel,
            out_shape=jax.ShapeDtypeStruct((Mp, Np), x.dtype),
            grid_spec=pltpu.PrefetchScalarGridSpec(
                num_scalar_prefetch=0,
                grid=(grid_m, grid_n, grid_k),
                in_specs=[
                    pl.BlockSpec((tm, tk), lambda i, j, k: (i, k)),   # x
                    pl.BlockSpec((tn, tk), lambda i, j, k: (j, k)),   # w fused
                    pl.BlockSpec((1, tn), lambda i, j, k: (0, j)),    # b fused
                ],
                out_specs=pl.BlockSpec((tm, tn), lambda i, j, k: (i, j)),
                scratch_shapes=[pltpu.VMEM((tm, tn), jnp.float32)],
            ),
            compiler_params=cparams,
        )(x2, w, b)
    else:
        wb, wi = weight_base, weight_ilayer
        bb = bias_base.reshape(1, N)
        bi = bias_ilayer.reshape(1, N)
        if (Np, Kp) != (N, K):
            wb = jnp.pad(wb, ((0, Np - N), (0, Kp - K)))
            wi = jnp.pad(wi, ((0, Np - N), (0, Kp - K)))
        if Np != N:
            bb = jnp.pad(bb, ((0, 0), (0, Np - N)))
            bi = jnp.pad(bi, ((0, 0), (0, Np - N)))
        il_arr = il_f32.reshape(1)

        kernel = functools.partial(_le_linear_fused_kernel, mxu_dtype=mxu_dtype)
        out = pl.pallas_call(
            kernel,
            out_shape=jax.ShapeDtypeStruct((Mp, Np), x.dtype),
            grid_spec=pltpu.PrefetchScalarGridSpec(
                num_scalar_prefetch=0,
                grid=(grid_m, grid_n, grid_k),
                in_specs=[
                    pl.BlockSpec(memory_space=pltpu.SMEM),            # ilayer
                    pl.BlockSpec((tm, tk), lambda i, j, k: (i, k)),   # x
                    pl.BlockSpec((tn, tk), lambda i, j, k: (j, k)),   # w_base
                    pl.BlockSpec((tn, tk), lambda i, j, k: (j, k)),   # w_ilayer
                    pl.BlockSpec((1, tn), lambda i, j, k: (0, j)),    # b_base
                    pl.BlockSpec((1, tn), lambda i, j, k: (0, j)),    # b_ilayer
                ],
                out_specs=pl.BlockSpec((tm, tn), lambda i, j, k: (i, j)),
                scratch_shapes=[pltpu.VMEM((tm, tn), jnp.float32)],
            ),
            compiler_params=cparams,
        )(il_arr, x2, wb, wi, bb, bi)

    if (Mp, Np) != (M, N):
        out = out[:M, :N]
    return out.reshape(*orig_lead, N)


def init_le_linear_params(key, in_features, out_features, dtype=jnp.float32):
    """Mirrors LELinear.reset_parameters: trunc_normal_(std=0.02), zero biases."""
    k_wb, k_wi = jax.random.split(key)
    std = 0.02
    weight_base = std * jax.random.truncated_normal(
        k_wb, -2.0, 2.0, (out_features, in_features), dtype)
    weight_ilayer = std * jax.random.truncated_normal(
        k_wi, -2.0, 2.0, (out_features, in_features), dtype)
    bias_base = jnp.zeros((out_features,), dtype)
    bias_ilayer = jnp.zeros((out_features,), dtype)
    return weight_base, weight_ilayer, bias_base, bias_ilayer


def _reference(x, wb, wi, bb, bi, ilayer):
    w = wb + ilayer * wi
    b = bb + ilayer * bi
    return jnp.einsum("...k,nk->...n", x, w) + b


if __name__ == "__main__":
    key = jax.random.PRNGKey(0)

    # ---- Small test: shapes matching a tiny transformer block usage. ----
    batch, seq, in_features, out_features = 2, 8, 32, 64
    k_x, k_p, k_b = jax.random.split(key, 3)
    x = jax.random.normal(k_x, (batch, seq, in_features), jnp.float32)
    wb, wi, bb, bi = init_le_linear_params(k_p, in_features, out_features)
    # Biases are zero at init; perturb so the bias path is exercised.
    bb = 0.1 * jax.random.normal(k_b, (out_features,), jnp.float32)
    bi = 0.05 * jnp.ones((out_features,), jnp.float32)
    ilayer = 3.0

    y_fused = jax.block_until_ready(
        le_linear(x, wb, wi, bb, bi, ilayer, prefuse=False))
    y_pref = jax.block_until_ready(
        le_linear(x, wb, wi, bb, bi, ilayer, prefuse=True))
    y_ref = _reference(x, wb, wi, bb, bi, ilayer)

    assert y_fused.shape == (batch, seq, out_features)
    assert jnp.allclose(y_fused, y_ref, atol=1e-4, rtol=1e-4), "fused mismatch"
    assert jnp.allclose(y_pref, y_ref, atol=1e-4, rtol=1e-4), "prefused mismatch"

    # ---- bias=None path (matches F.linear with bias=None). ----
    y_nb = jax.block_until_ready(le_linear(x, wb, wi, None, None, ilayer))
    y_nb_ref = jnp.einsum("...k,nk->...n", x, wb + ilayer * wi)
    assert jnp.allclose(y_nb, y_nb_ref, atol=1e-4, rtol=1e-4), "no-bias mismatch"

    # ---- bf16 inputs: exercises dtype-aware tm alignment (16 sublanes). ----
    xb = x.astype(jnp.bfloat16)
    wbb, wib = wb.astype(jnp.bfloat16), wi.astype(jnp.bfloat16)
    bbb, bib = bb.astype(jnp.bfloat16), bi.astype(jnp.bfloat16)
    y_bf = jax.block_until_ready(le_linear(xb, wbb, wib, bbb, bib, ilayer))
    y_bf_ref = _reference(xb.astype(jnp.float32), wbb.astype(jnp.float32),
                          wib.astype(jnp.float32), bbb.astype(jnp.float32),
                          bib.astype(jnp.float32), ilayer)
    assert jnp.allclose(y_bf.astype(jnp.float32), y_bf_ref,
                        atol=5e-2, rtol=5e-2), "bf16 mismatch"

    # ---- Larger test: multi-K grid (K=896 -> divisor-friendly tk, no pad),
    #      single-M-pass default, forced prefuse, and forced multi-M tiling. ----
    b2, s2, k2, n2 = 4, 128, 896, 512
    k_x2, k_p2, k_b2 = jax.random.split(jax.random.PRNGKey(1), 3)
    x2 = jax.random.normal(k_x2, (b2, s2, k2), jnp.float32)
    wb2, wi2, bb2, bi2 = init_le_linear_params(k_p2, k2, n2)
    bb2 = 0.1 * jax.random.normal(k_b2, (n2,), jnp.float32)
    bi2 = 0.05 * jnp.ones((n2,), jnp.float32)
    il2 = 5.0

    y2_auto = jax.block_until_ready(
        le_linear(x2, wb2, wi2, bb2, bi2, il2))                   # grid_m=1, in-kernel fused
    y2_pref = jax.block_until_ready(
        le_linear(x2, wb2, wi2, bb2, bi2, il2, prefuse=True))     # prefused path
    y2_multi = jax.block_until_ready(
        le_linear(x2, wb2, wi2, bb2, bi2, il2, tm=128))           # grid_m=4 -> auto prefuse
    y2_ref = _reference(x2, wb2, wi2, bb2, bi2, il2)

    assert jnp.allclose(y2_auto, y2_ref, atol=2e-3, rtol=2e-4), "big auto mismatch"
    assert jnp.allclose(y2_pref, y2_ref, atol=2e-3, rtol=2e-4), "big prefuse mismatch"
    assert jnp.allclose(y2_multi, y2_ref, atol=2e-3, rtol=2e-4), "big multi-M mismatch"

    print("KERNEL_OK")
</pallas_src>

<mosaic_0001>
module attributes {stable_mosaic.version = 11 : i64} {
  func.func @_le_linear_fused_kernel(%arg0: i32, %arg1: i32, %arg2: i32, %arg3: memref<1xf32, #tpu.memory_space<smem>>, %arg4: memref<16x128xf32, #tpu.memory_space<vmem>>, %arg5: memref<128x128xf32, #tpu.memory_space<vmem>>, %arg6: memref<128x128xf32, #tpu.memory_space<vmem>>, %arg7: memref<1x128xf32, #tpu.memory_space<vmem>>, %arg8: memref<1x128xf32, #tpu.memory_space<vmem>>, %arg9: memref<16x128xf32, #tpu.memory_space<vmem>>, %arg10: memref<16x128xf32, #tpu.memory_space<vmem>>) attributes {dimension_semantics = [#tpu.dimension_semantics<parallel>, #tpu.dimension_semantics<parallel>, #tpu.dimension_semantics<arbitrary>], iteration_bounds = array<i64: 1, 1, 1>, scalar_prefetch = 0 : i64, scratch_operands = 1 : i64, tpu.core_type = #tpu.core_type<tc>, window_params = [{transform_indices = @transform_0, window_bounds = array<i64: 1>}, {transform_indices = @transform_1, window_bounds = array<i64: 16, 128>}, {transform_indices = @transform_2, window_bounds = array<i64: 128, 128>}, {transform_indices = @transform_3, window_bounds = array<i64: 128, 128>}, {transform_indices = @transform_4, window_bounds = array<i64: 1, 128>}, {transform_indices = @transform_5, window_bounds = array<i64: 1, 128>}, {transform_indices = @transform_6, window_bounds = array<i64: 16, 128>}]} {
    %c0 = arith.constant 0 : index
    %0 = memref.load %arg3[%c0] : memref<1xf32, #tpu.memory_space<smem>>
    %c0_0 = arith.constant 0 : index
    %c0_1 = arith.constant 0 : index
    %1 = vector.load %arg5[%c0_0, %c0_1] : memref<128x128xf32, #tpu.memory_space<vmem>>, vector<128x128xf32>
    %c0_2 = arith.constant 0 : index
    %c0_3 = arith.constant 0 : index
    %2 = vector.load %arg6[%c0_2, %c0_3] : memref<128x128xf32, #tpu.memory_space<vmem>>, vector<128x128xf32>
    %3 = vector.broadcast %0 : f32 to vector<128x128xf32>
    %4 = arith.mulf %3, %2 : vector<128x128xf32>
    %5 = arith.addf %1, %4 : vector<128x128xf32>
    %c0_4 = arith.constant 0 : index
    %c0_5 = arith.constant 0 : index
    %6 = vector.load %arg4[%c0_4, %c0_5] : memref<16x128xf32, #tpu.memory_space<vmem>>, vector<16x128xf32>
    %cst = arith.constant dense<0.000000e+00> : vector<16x128xf32>
    %7 = tpu.matmul %6, %5, %cst {dimension_numbers = #tpu.dot_dimension_numbers<[1], [1], [0], [0], [0, 0, 1, 0], [], []>} : vector<16x128xf32>, vector<128x128xf32>, vector<16x128xf32> -> vector<16x128xf32>
    %c0_i32 = arith.constant 0 : i32
    %8 = arith.cmpi eq, %arg2, %c0_i32 : i32
    %9 = arith.extui %8 : i1 to i32
    %c0_i32_6 = arith.constant 0 : i32
    %10 = arith.cmpi ne, %9, %c0_i32_6 : i32
    scf.if %10 {
      %c0_11 = arith.constant 0 : index
      %c0_12 = arith.constant 0 : index
      %17 = vector.load %arg10[%c0_11, %c0_12] : memref<16x128xf32, #tpu.memory_space<vmem>>, vector<16x128xf32>
      tpu.vector_store %arg10[%c0_11, %c0_12], %7 {strides = array<i32>} : memref<16x128xf32, #tpu.memory_space<vmem>>, vector<16x128xf32>,
    } else {
    }
    %c0_i32_7 = arith.constant 0 : i32
    %11 = arith.cmpi sgt, %arg2, %c0_i32_7 : i32
    %12 = arith.extui %11 : i1 to i32
    %c0_i32_8 = arith.constant 0 : i32
    %13 = arith.cmpi ne, %12, %c0_i32_8 : i32
    scf.if %13 {
      %c0_11 = arith.constant 0 : index
      %c0_12 = arith.constant 0 : index
      %17 = vector.load %arg10[%c0_11, %c0_12] : memref<16x128xf32, #tpu.memory_space<vmem>>, vector<16x128xf32>
      %18 = arith.addf %17, %7 : vector<16x128xf32>
      %c0_13 = arith.constant 0 : index
      %c0_14 = arith.constant 0 : index
      %19 = vector.load %arg10[%c0_13, %c0_14] : memref<16x128xf32, #tpu.memory_space<vmem>>, vector<16x128xf32>
      tpu.vector_store %arg10[%c0_13, %c0_14], %18 {strides = array<i32>} : memref<16x128xf32, #tpu.memory_space<vmem>>, vector<16x128xf32>,
    } else {
    }
    %c0_i32_9 = arith.constant 0 : i32
    %14 = arith.cmpi eq, %arg2, %c0_i32_9 : i32
    %15 = arith.extui %14 : i1 to i32
    %c0_i32_10 = arith.constant 0 : i32
    %16 = arith.cmpi ne, %15, %c0_i32_10 : i32
    scf.if %16 {
      %c0_11 = arith.constant 0 : index
      %c0_12 = arith.constant 0 : index
      %17 = vector.load %arg7[%c0_11, %c0_12] : memref<1x128xf32, #tpu.memory_space<vmem>>, vector<1x128xf32>
      %c0_13 = arith.constant 0 : index
      %c0_14 = arith.constant 0 : index
      %18 = vector.load %arg8[%c0_13, %c0_14] : memref<1x128xf32, #tpu.memory_space<vmem>>, vector<1x128xf32>
      %19 = vector.broadcast %0 : f32 to vector<1x128xf32>
      %20 = arith.mulf %19, %18 : vector<1x128xf32>
      %21 = arith.addf %17, %20 : vector<1x128xf32>
      %c0_15 = arith.constant 0 : index
      %c0_16 = arith.constant 0 : index
      %22 = vector.load %arg10[%c0_15, %c0_16] : memref<16x128xf32, #tpu.memory_space<vmem>>, vector<16x128xf32>
      %23 = vector.broadcast %21 : vector<1x128xf32> to vector<16x128xf32>
      %24 = arith.addf %22, %23 : vector<16x128xf32>
      %c0_17 = arith.constant 0 : index
      %c0_18 = arith.constant 0 : index
      %25 = vector.load %arg9[%c0_17, %c0_18] : memref<16x128xf32, #tpu.memory_space<vmem>>, vector<16x128xf32>
      tpu.vector_store %arg9[%c0_17, %c0_18], %24 {strides = array<i32>} : memref<16x128xf32, #tpu.memory_space<vmem>>, vector<16x128xf32>,
    } else {
    }
    return
  }
  func.func @transform_0(%arg0: i32, %arg1: i32, %arg2: i32) -> i32 {
    %c0_i32 = arith.constant 0 : i32
    %c0_i32_0 = arith.constant 0 : i32
    return %c0_i32 : i32
  }
  func.func @transform_1(%arg0: i32, %arg1: i32, %arg2: i32) -> (i32, i32) {
    %c0_i32 = arith.constant 0 : i32
    return %arg0, %arg2 : i32, i32
  }
  func.func @transform_2(%arg0: i32, %arg1: i32, %arg2: i32) -> (i32, i32) {
    %c0_i32 = arith.constant 0 : i32
    return %arg1, %arg2 : i32, i32
  }
  func.func @transform_3(%arg0: i32, %arg1: i32, %arg2: i32) -> (i32, i32) {
    %c0_i32 = arith.constant 0 : i32
    return %arg1, %arg2 : i32, i32
  }
  func.func @transform_4(%arg0: i32, %arg1: i32, %arg2: i32) -> (i32, i32) {
    %c0_i32 = arith.constant 0 : i32
    %c0_i32_0 = arith.constant 0 : i32
    return %c0_i32, %arg1 : i32, i32
  }
  func.func @transform_5(%arg0: i32, %arg1: i32, %arg2: i32) -> (i32, i32) {
    %c0_i32 = arith.constant 0 : i32
    %c0_i32_0 = arith.constant 0 : i32
    return %c0_i32, %arg1 : i32, i32
  }
  func.func @transform_6(%arg0: i32, %arg1: i32, %arg2: i32) -> (i32, i32) {
    %c0_i32 = arith.constant 0 : i32
    return %arg0, %arg1 : i32, i32
  }
}

</mosaic_0001>

<llo_original>
// kernel: tpu_custom_call.1
$region0: #{tpu_custom_call.1}
  #allocation0 [shape = 'u32[]', space=smem, size = 0x4, offset = 0x4, fixed_abs, tag = 'smem constant byte address 0x4 - core index']
  #allocation1 [shape = 'u32[144,128]{1,0:T(1,128)}', space=vmem, size = 0x12000, scoped, tag = 'internal scratch']
  #allocation2 [shape = 'f32[16,128]{1,0:T(8,128)}', space=vmem, size = 0x2000, scoped, tag = 'scratch operand']
  #allocation3 [shape = 'f32[1]{0:T(128)S(6)}', space=smem, size = 0x200, scoped, tag = 'scoped memory for tpu_custom_call.1']
  %s0 = inlined_call_operand.<no memory space> [shape: f32[1], index: 0, kind: input, shape index: {}]
  %s1 = inlined_call_operand.hbm [shape: f32[16,128], index: 1, kind: input, shape index: {}]
  %s2 = inlined_call_operand.hbm [shape: f32[128,128], index: 2, kind: input, shape index: {}]
  %s3 = inlined_call_operand.hbm [shape: f32[128,128], index: 3, kind: input, shape index: {}]
  %s4 = inlined_call_operand.vmem [shape: f32[1,128], index: 4, kind: input, shape index: {}]
  %s5 = inlined_call_operand.vmem [shape: f32[1,128], index: 5, kind: input, shape index: {}]
  %s6 = inlined_call_operand.hbm [shape: f32[16,128], index: 6, kind: output, shape index: {}]
  %s7 = sld [smem:[#allocation0]]
  $region58: #{tpu_custom_call.1} parent=0
    _
  %s9 = ssub.s32 1, %s7
  %s10 = scalar_select 0, %s9, %s7
  %11 = sst [smem:[#allocation3]] %s0
  $region1: #{tpu_custom_call.1} parent=0
    #allocation4 [shape = 'u8[8192]{0}', space=vmem, size = 0x2000, scoped, tag = 'input window, operand 1, single buffered']
    #allocation5 [shape = 's32[1]{0}', space=sflag, size = 0x4, scoped, tag = 'scoped memory for tpu_custom_call.1']
    #allocation6 [shape = 's32[1]{0}', space=sflag, size = 0x4, scoped, tag = 'scoped memory for tpu_custom_call.1']
    #allocation7 [shape = 'u8[65536]{0}', space=vmem, size = 0x10000, scoped, tag = 'input window, operand 2, single buffered']
    #allocation8 [shape = 's32[1]{0}', space=sflag, size = 0x4, scoped, tag = 'scoped memory for tpu_custom_call.1']
    #allocation9 [shape = 'u8[65536]{0}', space=vmem, size = 0x10000, scoped, tag = 'input window, operand 3, single buffered']
    #allocation10 [shape = 'u8[8192]{0}', space=vmem, size = 0x2000, scoped, tag = 'output window, operand 0, single buffered']
    %12 = vsyncpa [#allocation5], 0
    %13 = vsyncpa [#allocation8], 0
    %14 = vsyncpa [#allocation6], 0
    // Predicated region
    $region2: #{tpu_custom_call.1} parent=1 // pred_check
      _
    $region3: #{tpu_custom_call.1} parent=1 // pred_check_branch
      %16 = sbr.rel (0) target = $region5
    $region4: #{tpu_custom_call.1} parent=1 // pred_region
      _
    $region5: #{tpu_custom_call.1} parent=1 // pred_fallthru
      _
    // Predicated region
    $region6: #{tpu_custom_call.1} parent=1 // pred_check
      _
    $region7: #{tpu_custom_call.1} parent=1 // pred_check_branch
      %18 = sbr.rel (0) target = $region9
    $region8: #{tpu_custom_call.1} parent=1 // pred_region
      %s20 = ssub.s32 256, 256
      %21 = vsyncadd [#allocation5], %s20
      %s22 = sshll.u32 [#allocation4], 4
      %s23 = int_to_ptr.vmem [resolvable:$true] %s22
      %28 = dma.hbm_to_vmem [thread:$0]  %s1, 256, %s23, [#allocation5], 128, 128, 8
    $region9: #{tpu_custom_call.1} parent=1 // pred_fallthru
      _
    // Predicated region
    $region10: #{tpu_custom_call.1} parent=1 // pred_check
      _
    $region11: #{tpu_custom_call.1} parent=1 // pred_check_branch
      %30 = sbr.rel (0) target = $region13
    $region12: #{tpu_custom_call.1} parent=1 // pred_region
      %s32 = ssub.s32 2048, 2048
      %33 = vsyncadd [#allocation8], %s32
      %s34 = sshll.u32 [#allocation7], 4
      %s35 = int_to_ptr.vmem [resolvable:$true] %s34
      %40 = dma.hbm_to_vmem [thread:$0]  %s2, 2048, %s35, [#allocation8], 128, 128, 8
    $region13: #{tpu_custom_call.1} parent=1 // pred_fallthru
      _
    // Predicated region
    $region14: #{tpu_custom_call.1} parent=1 // pred_check
      _
    $region15: #{tpu_custom_call.1} parent=1 // pred_check_branch
      %42 = sbr.rel (0) target = $region17
    $region16: #{tpu_custom_call.1} parent=1 // pred_region
      %s44 = ssub.s32 2048, 2048
      %45 = vsyncadd [#allocation8], %s44
      %s46 = sshll.u32 [#allocation9], 4
      %s47 = int_to_ptr.vmem [resolvable:$true] %s46
      %52 = dma.hbm_to_vmem [thread:$0]  %s3, 2048, %s47, [#allocation8], 128, 128, 8
    $region17: #{tpu_custom_call.1} parent=1 // pred_fallthru
      _
    // Predicated region
    $region18: #{tpu_custom_call.1} parent=1 // pred_check
      _
    $region19: #{tpu_custom_call.1} parent=1 // pred_check_branch
      %54 = sbr.rel (0) target = $region21
    $region20: #{tpu_custom_call.1} parent=1 // pred_region
      _
    $region21: #{tpu_custom_call.1} parent=1 // pred_fallthru
      _
    // Predicated region
    $region22: #{tpu_custom_call.1} parent=1 // pred_check
      _
    $region23: #{tpu_custom_call.1} parent=1 // pred_check_branch
      %56 = sbr.rel (0) target = $region25
    $region24: #{tpu_custom_call.1} parent=1 // pred_region
      _
    $region25: #{tpu_custom_call.1} parent=1 // pred_fallthru
      _
    // Predicated region
    $region26: #{tpu_custom_call.1} parent=1 // pred_check
      _
    $region27: #{tpu_custom_call.1} parent=1 // pred_check_branch
      %58 = sbr.rel (0) target = $region29
    $region28: #{tpu_custom_call.1} parent=1 // pred_region
      %59 = dma.done [#allocation5], 256
    $region29: #{tpu_custom_call.1} parent=1 // pred_fallthru
      _
    // Predicated region
    $region30: #{tpu_custom_call.1} parent=1 // pred_check
      _
    $region31: #{tpu_custom_call.1} parent=1 // pred_check_branch
      %61 = sbr.rel (0) target = $region33
    $region32: #{tpu_custom_call.1} parent=1 // pred_region
      %62 = dma.done [#allocation8], 2048
    $region33: #{tpu_custom_call.1} parent=1 // pred_fallthru
      _
    // Predicated region
    $region34: #{tpu_custom_call.1} parent=1 // pred_check
      _
    $region35: #{tpu_custom_call.1} parent=1 // pred_check_branch
      %64 = sbr.rel (0) target = $region37
    $region36: #{tpu_custom_call.1} parent=1 // pred_region
      %65 = dma.done [#allocation8], 2048
    $region37: #{tpu_custom_call.1} parent=1 // pred_fallthru
      _
    %s66 = sld [smem:[#allocation3]]
    %v67 = vld [vmem:[#allocation7] sm:$0xff]
    %v68 = vld [vmem:[#allocation7 + $0x8] sm:$0xff]
    %v69 = vld [vmem:[#allocation7 + $0x10] sm:$0xff]
    %v70 = vld [vmem:[#allocation7 + $0x18] sm:$0xff]
    %v71 = vld [vmem:[#allocation7 + $0x20] sm:$0xff]
    %v72 = vld [vmem:[#allocation7 + $0x28] sm:$0xff]
    %v73 = vld [vmem:[#allocation7 + $0x30] sm:$0xff]
    %v74 = vld [vmem:[#allocation7 + $0x38] sm:$0xff]
    %v75 = vld [vmem:[#allocation7 + $0x40] sm:$0xff]
    %v76 = vld [vmem:[#allocation7 + $0x48] sm:$0xff]
    %v77 = vld [vmem:[#allocation7 + $0x50] sm:$0xff]
    %v78 = vld [vmem:[#allocation7 + $0x58] sm:$0xff]
    %v79 = vld [vmem:[#allocation7 + $0x60] sm:$0xff]
    %v80 = vld [vmem:[#allocation7 + $0x68] sm:$0xff]
    %v81 = vld [vmem:[#allocation7 + $0x70] sm:$0xff]
    %v82 = vld [vmem:[#allocation7 + $0x78] sm:$0xff]
    %v83 = vld [vmem:[#allocation9] sm:$0xff]
    %v84 = vld [vmem:[#allocation9 + $0x8] sm:$0xff]
    %v85 = vld [vmem:[#allocation9 + $0x10] sm:$0xff]
    %v86 = vld [vmem:[#allocation9 + $0x18] sm:$0xff]
    %v87 = vld [vmem:[#allocation9 + $0x20] sm:$0xff]
    %v88 = vld [vmem:[#allocation9 + $0x28] sm:$0xff]
    %v89 = vld [vmem:[#allocation9 + $0x30] sm:$0xff]
    %v90 = vld [vmem:[#allocation9 + $0x38] sm:$0xff]
    %v91 = vld [vmem:[#allocation9 + $0x40] sm:$0xff]
    %v92 = vld [vmem:[#allocation9 + $0x48] sm:$0xff]
    %v93 = vld [vmem:[#allocation9 + $0x50] sm:$0xff]
    %v94 = vld [vmem:[#allocation9 + $0x58] sm:$0xff]
    %v95 = vld [vmem:[#allocation9 + $0x60] sm:$0xff]
    %v96 = vld [vmem:[#allocation9 + $0x68] sm:$0xff]
    %v97 = vld [vmem:[#allocation9 + $0x70] sm:$0xff]
    %v98 = vld [vmem:[#allocation9 + $0x78] sm:$0xff]
    %v99 = vstv %s66
    %v100 = vmul.f32 %v99, %v83
    %v101 = vmul.f32 %v99, %v84
    %v102 = vmul.f32 %v99, %v85
    %v103 = vmul.f32 %v99, %v86
    %v104 = vmul.f32 %v99, %v87
    %v105 = vmul.f32 %v99, %v88
    %v106 = vmul.f32 %v99, %v89
    %v107 = vmul.f32 %v99, %v90
    %v108 = vmul.f32 %v99, %v91
    %v109 = vmul.f32 %v99, %v92
    %v110 = vmul.f32 %v99, %v93
    %v111 = vmul.f32 %v99, %v94
    %v112 = vmul.f32 %v99, %v95
    %v113 = vmul.f32 %v99, %v96
    %v114 = vmul.f32 %v99, %v97
    %v115 = vmul.f32 %v99, %v98
    %v116 = vadd.f32 %v67, %v100
    %v117 = vadd.f32 %v68, %v101
    %v118 = vadd.f32 %v69, %v102
    %v119 = vadd.f32 %v70, %v103
    %v120 = vadd.f32 %v71, %v104
    %v121 = vadd.f32 %v72, %v105
    %v122 = vadd.f32 %v73, %v106
    %v123 = vadd.f32 %v74, %v107
    %v124 = vadd.f32 %v75, %v108
    %v125 = vadd.f32 %v76, %v109
    %v126 = vadd.f32 %v77, %v110
    %v127 = vadd.f32 %v78, %v111
    %v128 = vadd.f32 %v79, %v112
    %v129 = vadd.f32 %v80, %v113
    %v130 = vadd.f32 %v81, %v114
    %v131 = vadd.f32 %v82, %v115
    %v132 = vld [vmem:[#allocation4] sm:$0xff]
    %v133 = vld [vmem:[#allocation4 + $0x8] sm:$0xff]
    %134 = vmatprep.subr.mxu0 0.0
    %135 = vmatpush1.xpose.msra.mxu0 %v116
    %136 = vmatprep.subr.mxu0 0.0
    %137 = vmatpush1.xpose.msra.mxu0 %v117
    %138 = vmatprep.subr.mxu0 0.0
    %139 = vmatpush1.xpose.msra.mxu0 %v118
    %140 = vmatprep.subr.mxu0 0.0
    %141 = vmatpush1.xpose.msra.mxu0 %v119
    %142 = vmatprep.subr.mxu0 0.0
    %143 = vmatpush1.xpose.msra.mxu0 %v120
    %144 = vmatprep.subr.mxu0 0.0
    %145 = vmatpush1.xpose.msra.mxu0 %v121
    %146 = vmatprep.subr.mxu0 0.0
    %147 = vmatpush1.xpose.msra.mxu0 %v122
    %148 = vmatprep.subr.mxu0 0.0
    %149 = vmatpush1.xpose.msra.mxu0 %v123
    %150 = vmatprep.subr.mxu0 0.0
    %151 = vmatpush1.xpose.msra.mxu0 %v124
    %152 = vmatprep.subr.mxu0 0.0
    %153 = vmatpush1.xpose.msra.mxu0 %v125
    %154 = vmatprep.subr.mxu0 0.0
    %155 = vmatpush1.xpose.msra.mxu0 %v126
    %156 = vmatprep.subr.mxu0 0.0
    %157 = vmatpush1.xpose.msra.mxu0 %v127
    %158 = vmatprep.subr.mxu0 0.0
    %159 = vmatpush1.xpose.msra.mxu0 %v128
    %160 = vmatprep.subr.mxu0 0.0
    %161 = vmatpush1.xpose.msra.mxu0 %v129
    %162 = vmatprep.subr.mxu0 0.0
    %163 = vmatpush1.xpose.msra.mxu0 %v130
    %164 = vmatprep.subr.mxu0 0.0
    %165 = vmatpush1.xpose.msra.mxu0 %v131
    %166 = vmatprep.subr.mxu0 0.0
    %167 = vmatpush1.xpose.msra.mxu0 0.0
    %168 = vmatprep.subr.mxu0 0.0
    %169 = vmatpush1.xpose.msra.mxu0 0.0
    %170 = vmatprep.subr.mxu0 0.0
    %171 = vmatpush1.xpose.msra.mxu0 0.0
    %172 = vmatprep.subr.mxu0 0.0
    %173 = vmatpush1.xpose.msra.mxu0 0.0
    %174 = vmatprep.subr.mxu0 0.0
    %175 = vmatpush1.xpose.msra.mxu0 0.0
    %176 = vmatprep.subr.mxu0 0.0
    %177 = vmatpush1.xpose.msra.mxu0 0.0
    %178 = vmatprep.subr.mxu0 0.0
    %179 = vmatpush1.xpose.msra.mxu0 0.0
    %180 = vmatprep.subr.mxu0 0.0
    %181 = vmatpush1.xpose.msra.mxu0 0.0
    %182 = vmatprep.subr.mxu0 0.0
    %183 = vmatpush1.xpose.msra.mxu0 0.0
    %184 = vmatprep.subr.mxu0 0.0
    %185 = vmatpush1.xpose.msra.mxu0 0.0
    %186 = vmatprep.subr.mxu0 0.0
    %187 = vmatpush1.xpose.msra.mxu0 0.0
    %188 = vmatprep.subr.mxu0 0.0
    %189 = vmatpush1.xpose.msra.mxu0 0.0
    %190 = vmatprep.subr.mxu0 0.0
    %191 = vmatpush1.xpose.msra.mxu0 0.0
    %192 = vmatprep.subr.mxu0 0.0
    %193 = vmatpush1.xpose.msra.mxu0 0.0
    %194 = vmatprep.subr.mxu0 0.0
    %195 = vmatpush1.xpose.msra.mxu0 0.0
    %196 = vmatprep.subr.mxu0 0.0
    %197 = vmatpush1.xpose.msra.mxu0 0.0
    %198 = vmatprep.mubr.f32.mxu0 0.0
    %199 = vmatmul.mubr.f32.gmra.mrb[0].mxu0 %v132
    %v200 = vpop.f32.mrb[0].mxu0
    %v201 = vadd.f32 0.0, %v200
    %v202 = vpop.f32.mrb[0].mxu0
    %203 = vmatprep.mubr.f32.mxu0 0.0
    %204 = vmatmul.mubr.f32.gmra.mrb[0].mxu0 %v133
    %v205 = vpop.f32.mrb[0].mxu0
    %v206 = vadd.f32 0.0, %v205
    %v207 = vpop.f32.mrb[0].mxu0
    %208 = vdwg.mxu0
    %p209 = scmp.eq.s32.totalorder 0, 0
    // Predicated region
    $region38: #{tpu_custom_call.1} parent=1 // pred_check
      %p210 = pneg %p209
    $region39: #{tpu_custom_call.1} parent=1 // pred_check_branch
      %212 = sbr.rel (%p210) target = $region41
    $region40: #{tpu_custom_call.1} parent=1 // pred_region
      %213 = vst [vmem:[#allocation2] sm:$0xff] %v201
      %214 = vst [vmem:[#allocation2 + $0x8] sm:$0xff] %v206
    $region41: #{tpu_custom_call.1} parent=1 // pred_fallthru
      _
    %p215 = scmp.gt.s32.totalorder 0, 0
    // Predicated region
    $region42: #{tpu_custom_call.1} parent=1 // pred_check
      %p216 = pneg %p215
    $region43: #{tpu_custom_call.1} parent=1 // pred_check_branch
      %218 = sbr.rel (%p216) target = $region45
    $region44: #{tpu_custom_call.1} parent=1 // pred_region
      %v219 = vld [vmem:[#allocation2] sm:$0xff]
      %v220 = vld [vmem:[#allocation2 + $0x8] sm:$0xff]
      %v221 = vadd.f32 %v219, %v201
      %v222 = vadd.f32 %v220, %v206
      %223 = vst [vmem:[#allocation2] sm:$0xff] %v221
      %224 = vst [vmem:[#allocation2 + $0x8] sm:$0xff] %v222
    $region45: #{tpu_custom_call.1} parent=1 // pred_fallthru
      _
    // Predicated region
    $region46: #{tpu_custom_call.1} parent=1 // pred_check
      %p225 = pneg %p209
    $region47: #{tpu_custom_call.1} parent=1 // pred_check_branch
      %227 = sbr.rel (%p225) target = $region49
    $region48: #{tpu_custom_call.1} parent=1 // pred_region
      %v228 = vld [vmem:[%s4] sm:$0x1]
      %v229 = vld [vmem:[%s5] sm:$0x1]
      %v230 = vmul.f32 %v99, %v229
      %v231 = vadd.f32 %v228, %v230
      %v232 = vld [vmem:[#allocation2] sm:$0xff]
      %v233 = vld [vmem:[#allocation2 + $0x8] sm:$0xff]
      %v235 = vlaneseq
      %v236 = vshrl.u32 %v235, 7
      %v237 = vsub.s32 0, %v236
      %v238 = vrot.slane %v231, %v237
      %v240 = vadd.f32 %v232, %v238
      %v241 = vadd.f32 %v233, %v238
      %242 = vst [vmem:[#allocation10] sm:$0xff] %v240
      %243 = vst [vmem:[#allocation10 + $0x8] sm:$0xff] %v241
    $region49: #{tpu_custom_call.1} parent=1 // pred_fallthru
      _
    // Predicated region
    $region50: #{tpu_custom_call.1} parent=1 // pred_check
      _
    $region51: #{tpu_custom_call.1} parent=1 // pred_check_branch
      %245 = sbr.rel (0) target = $region53
    $region52: #{tpu_custom_call.1} parent=1 // pred_region
      %s247 = ssub.s32 256, 256
      %248 = vsyncadd [#allocation6], %s247
      %s249 = sshll.u32 [#allocation10], 4
      %s250 = int_to_ptr.vmem [resolvable:$true] %s249
      %255 = dma.vmem_to_hbm [thread:$0]  %s250, 256, %s6, [#allocation6], 128, 128, 8
    $region53: #{tpu_custom_call.1} parent=1 // pred_fallthru
      _
    // Predicated region
    $region54: #{tpu_custom_call.1} parent=1 // pred_check
      _
    $region55: #{tpu_custom_call.1} parent=1 // pred_check_branch
      %257 = sbr.rel (0) target = $region57
    $region56: #{tpu_custom_call.1} parent=1 // pred_region
      %258 = dma.done [#allocation6], 256
    $region57: #{tpu_custom_call.1} parent=1 // pred_fallthru
      _
    %259 = vsyncpa [#allocation5], 1
    %260 = vsyncpa [#allocation8], 1
    %261 = vsyncpa [#allocation6], 1

</llo_original>
